<compile_context>
chip_gen: v7x
topology: tpu7x:2x2x1
jax: 0.10.0
libtpu: 0.0.40
codegen_flags: <defaults>
</compile_context>

<pallas_src>
import jax
import jax.numpy as jnp
from jax.experimental import pallas as pl
from jax.experimental.pallas import tpu as pltpu

HIDDEN = 64


def _round_up(n, m):
    return ((n + m - 1) // m) * m


def policy_kernel(x_ref, w1_ref, w2_ref, w3_ref, b_ref, o_ref):
    out_dim = o_ref.shape[-1]

    # Biases (packed (3, HIDDEN) f32 operand; row 2 holds b3 zero-padded).
    b1 = b_ref[0:1, :]                      # (1, HIDDEN) f32
    b2 = b_ref[1:2, :]                      # (1, HIDDEN) f32
    b3 = b_ref[2:3, :][:, :out_dim]         # (1, out_dim) f32 (value-level lane slice)

    # Layer 1: Linear(in, 64) + ReLU  — bf16 MXU operands, f32 accumulate/elementwise.
    x = x_ref[...].astype(jnp.bfloat16)
    h1 = jnp.dot(x, w1_ref[...], preferred_element_type=jnp.float32) + b1
    h1 = jnp.maximum(h1, 0.0)

    # Layer 2: Linear(64, 64) + ReLU
    h2 = jnp.dot(h1.astype(jnp.bfloat16), w2_ref[...],
                 preferred_element_type=jnp.float32) + b2
    h2 = jnp.maximum(h2, 0.0)

    # Layer 3: Linear(64, out) + Tanh, then clamp(-0.9, 0.9)
    h3 = jnp.dot(h2.astype(jnp.bfloat16), w3_ref[...],
                 preferred_element_type=jnp.float32) + b3
    o_ref[...] = jnp.clip(jnp.tanh(h3), -0.9, 0.9).astype(o_ref.dtype)


def prepare_kernel_params(params):
    """Raw f32 torch-style params -> kernel operands: bf16 weights + packed f32 biases."""
    w1, b1, w2, b2, w3, b3 = params
    hid = w1.shape[1]
    out_dim = w3.shape[1]
    b_all = jnp.zeros((3, hid), jnp.float32)
    b_all = b_all.at[0, :].set(b1[0])
    b_all = b_all.at[1, :].set(b2[0])
    b_all = b_all.at[2, :out_dim].set(b3[0])
    return (w1.astype(jnp.bfloat16),
            w2.astype(jnp.bfloat16),
            w3.astype(jnp.bfloat16),
            b_all)


def policy_forward(x, kernel_params, *, block_m=256):
    """x: (batch, in_dim) f32. kernel_params from prepare_kernel_params()."""
    w1, w2, w3, b_all = kernel_params
    batch, in_dim = x.shape
    hid = w1.shape[1]
    out_dim = w3.shape[1]

    # Batch tiling: pad rows to a multiple of the row-block (multiple of 8 sublanes).
    bm = min(block_m, _round_up(batch, 8))
    b_pad = _round_up(batch, bm)
    x_p = x if b_pad == batch else jnp.pad(x, ((0, b_pad - batch), (0, 0)))
    grid = (b_pad // bm,)

    flops = 2 * b_pad * (in_dim * hid + hid * hid + hid * out_dim)
    bytes_accessed = (x_p.size * 4 + (w1.size + w2.size + w3.size) * 2
                      + b_all.size * 4 + b_pad * out_dim * 4)

    out = pl.pallas_call(
        policy_kernel,
        out_shape=jax.ShapeDtypeStruct((b_pad, out_dim), jnp.float32),
        grid=grid,
        in_specs=[
            # Activations stream block_m rows per grid step.
            pl.BlockSpec((bm, in_dim), lambda i: (i, 0)),
            # Weights / packed biases: constant block index -> DMA'd once, VMEM-resident.
            pl.BlockSpec((in_dim, hid), lambda i: (0, 0)),
            pl.BlockSpec((hid, hid), lambda i: (0, 0)),
            pl.BlockSpec((hid, out_dim), lambda i: (0, 0)),
            pl.BlockSpec((3, hid), lambda i: (0, 0)),
        ],
        out_specs=pl.BlockSpec((bm, out_dim), lambda i: (i, 0)),
        compiler_params=pltpu.CompilerParams(dimension_semantics=("parallel",)),
        cost_estimate=pl.CostEstimate(flops=flops,
                                      transcendentals=b_pad * out_dim,
                                      bytes_accessed=bytes_accessed),
    )(x_p, w1, w2, w3, b_all)
    return out[:batch]


def init_params(key, input_shape, output_shape):
    """Deterministic init mimicking torch.nn.Linear (U[-1/sqrt(fan_in), 1/sqrt(fan_in)])."""
    dims = [(input_shape, HIDDEN), (HIDDEN, HIDDEN), (HIDDEN, output_shape)]
    params = []
    for (fan_in, fan_out) in dims:
        key, kw, kb = jax.random.split(key, 3)
        bound = 1.0 / jnp.sqrt(jnp.float32(fan_in))
        w = jax.random.uniform(kw, (fan_in, fan_out), jnp.float32, -bound, bound)
        b = jax.random.uniform(kb, (1, fan_out), jnp.float32, -bound, bound)
        params.extend([w, b])
    return tuple(params)


def reference_forward_f32(x, params):
    w1, b1, w2, b2, w3, b3 = params
    h = jnp.maximum(x @ w1 + b1, 0.0)
    h = jnp.maximum(h @ w2 + b2, 0.0)
    return jnp.clip(jnp.tanh(h @ w3 + b3), -0.9, 0.9)


def reference_forward_bf16(x, params):
    """Plain-JAX reference with the same bf16-operand / f32-accumulate math as the kernel."""
    w1, b1, w2, b2, w3, b3 = params
    bf = jnp.bfloat16
    h = jnp.maximum(jnp.dot(x.astype(bf), w1.astype(bf),
                            preferred_element_type=jnp.float32) + b1, 0.0)
    h = jnp.maximum(jnp.dot(h.astype(bf), w2.astype(bf),
                            preferred_element_type=jnp.float32) + b2, 0.0)
    h = jnp.dot(h.astype(bf), w3.astype(bf), preferred_element_type=jnp.float32) + b3
    return jnp.clip(jnp.tanh(h), -0.9, 0.9)


if __name__ == "__main__":
    # BipedalWalker-v3: observation dim 24, action dim 4.
    input_shape, output_shape = 24, 4

    key = jax.random.PRNGKey(0)
    key, kp = jax.random.split(key)
    raw_params = init_params(kp, input_shape, output_shape)
    kparams = prepare_kernel_params(raw_params)

    # Two cases: a tiny batch (single grid step) and a rollout-sized batch that is
    # not a multiple of the row block (exercises padding + multi-step batch grid).
    for batch in (8, 500):
        key, kx = jax.random.split(key)
        x = jax.random.normal(kx, (batch, input_shape), jnp.float32)

        out = jax.block_until_ready(policy_forward(x, kparams))
        assert out.shape == (batch, output_shape)

        ref_bf = reference_forward_bf16(x, raw_params)
        ref_32 = reference_forward_f32(x, raw_params)
        assert jnp.allclose(out, ref_bf, atol=1e-3, rtol=1e-3), \
            f"mismatch vs bf16-matched reference (batch={batch})"
        assert jnp.allclose(out, ref_32, atol=3e-2, rtol=3e-2), \
            f"mismatch vs f32 reference (batch={batch})"

    print("KERNEL_OK")
</pallas_src>

<mosaic_0001>
module attributes {stable_mosaic.version = 11 : i64} {
  func.func @policy_kernel(%arg0: i32, %arg1: memref<8x24xf32, #tpu.memory_space<vmem>>, %arg2: memref<24x64xbf16, #tpu.memory_space<vmem>>, %arg3: memref<64x64xbf16, #tpu.memory_space<vmem>>, %arg4: memref<64x4xbf16, #tpu.memory_space<vmem>>, %arg5: memref<3x64xf32, #tpu.memory_space<vmem>>, %arg6: memref<8x4xf32, #tpu.memory_space<vmem>>) attributes {dimension_semantics = [#tpu.dimension_semantics<parallel>], iteration_bounds = array<i64: 1>, scalar_prefetch = 0 : i64, scratch_operands = 0 : i64, tpu.core_type = #tpu.core_type<tc>, window_params = [{transform_indices = @transform_0, window_bounds = array<i64: 8, 24>}, {pipeline_mode = #tpu.pipeline_mode<synchronous>, transform_indices = @transform_1, window_bounds = array<i64: 24, 64>}, {pipeline_mode = #tpu.pipeline_mode<synchronous>, transform_indices = @transform_2, window_bounds = array<i64: 64, 64>}, {pipeline_mode = #tpu.pipeline_mode<synchronous>, transform_indices = @transform_3, window_bounds = array<i64: 64, 4>}, {pipeline_mode = #tpu.pipeline_mode<synchronous>, transform_indices = @transform_4, window_bounds = array<i64: 3, 64>}, {transform_indices = @transform_5, window_bounds = array<i64: 8, 4>}]} {
    %c0 = arith.constant 0 : index
    %c0_0 = arith.constant 0 : index
    %0 = vector.load %arg5[%c0, %c0_0] : memref<3x64xf32, #tpu.memory_space<vmem>>, vector<1x64xf32>
    %c1 = arith.constant 1 : index
    %c0_1 = arith.constant 0 : index
    %1 = vector.load %arg5[%c1, %c0_1] : memref<3x64xf32, #tpu.memory_space<vmem>>, vector<1x64xf32>
    %c2 = arith.constant 2 : index
    %c0_2 = arith.constant 0 : index
    %2 = vector.load %arg5[%c2, %c0_2] : memref<3x64xf32, #tpu.memory_space<vmem>>, vector<1x64xf32>
    %3 = vector.extract_strided_slice %2 {offsets = [0, 0], sizes = [1, 4], strides = [1, 1]} : vector<1x64xf32> to vector<1x4xf32>
    %c0_3 = arith.constant 0 : index
    %c0_4 = arith.constant 0 : index
    %4 = vector.load %arg1[%c0_3, %c0_4] : memref<8x24xf32, #tpu.memory_space<vmem>>, vector<8x24xf32>
    %5 = arith.truncf %4 : vector<8x24xf32> to vector<8x24xbf16>
    %c0_5 = arith.constant 0 : index
    %c0_6 = arith.constant 0 : index
    %6 = vector.load %arg2[%c0_5, %c0_6] : memref<24x64xbf16, #tpu.memory_space<vmem>>, vector<24x64xbf16>
    %cst = arith.constant dense<0.000000e+00> : vector<8x64xf32>
    %7 = tpu.matmul %5, %6, %cst {dimension_numbers = #tpu.dot_dimension_numbers<[1], [0], [0], [1], [0, 0, 1, 1], [], []>} : vector<8x24xbf16>, vector<24x64xbf16>, vector<8x64xf32> -> vector<8x64xf32>
    %8 = vector.broadcast %0 : vector<1x64xf32> to vector<8x64xf32>
    %9 = arith.addf %7, %8 : vector<8x64xf32>
    %cst_7 = arith.constant 0.000000e+00 : f32
    %10 = vector.broadcast %cst_7 : f32 to vector<8x64xf32>
    %11 = arith.maximumf %9, %10 : vector<8x64xf32>
    %12 = arith.truncf %11 : vector<8x64xf32> to vector<8x64xbf16>
    %c0_8 = arith.constant 0 : index
    %c0_9 = arith.constant 0 : index
    %13 = vector.load %arg3[%c0_8, %c0_9] : memref<64x64xbf16, #tpu.memory_space<vmem>>, vector<64x64xbf16>
    %cst_10 = arith.constant dense<0.000000e+00> : vector<8x64xf32>
    %14 = tpu.matmul %12, %13, %cst_10 {dimension_numbers = #tpu.dot_dimension_numbers<[1], [0], [0], [1], [0, 0, 1, 1], [], []>} : vector<8x64xbf16>, vector<64x64xbf16>, vector<8x64xf32> -> vector<8x64xf32>
    %15 = vector.broadcast %1 : vector<1x64xf32> to vector<8x64xf32>
    %16 = arith.addf %14, %15 : vector<8x64xf32>
    %cst_11 = arith.constant 0.000000e+00 : f32
    %17 = vector.broadcast %cst_11 : f32 to vector<8x64xf32>
    %18 = arith.maximumf %16, %17 : vector<8x64xf32>
    %19 = arith.truncf %18 : vector<8x64xf32> to vector<8x64xbf16>
    %c0_12 = arith.constant 0 : index
    %c0_13 = arith.constant 0 : index
    %20 = vector.load %arg4[%c0_12, %c0_13] : memref<64x4xbf16, #tpu.memory_space<vmem>>, vector<64x4xbf16>
    %cst_14 = arith.constant dense<0.000000e+00> : vector<8x4xf32>
    %21 = tpu.matmul %19, %20, %cst_14 {dimension_numbers = #tpu.dot_dimension_numbers<[1], [0], [0], [1], [0, 0, 1, 1], [], []>} : vector<8x64xbf16>, vector<64x4xbf16>, vector<8x4xf32> -> vector<8x4xf32>
    %22 = vector.broadcast %3 : vector<1x4xf32> to vector<8x4xf32>
    %23 = arith.addf %21, %22 : vector<8x4xf32>
    %24 = math.tanh %23 : vector<8x4xf32>
    %cst_15 = arith.constant -0.899999976 : f32
    %cst_16 = arith.constant 0.899999976 : f32
    %25 = vector.broadcast %cst_15 : f32 to vector<8x4xf32>
    %26 = arith.maximumf %25, %24 : vector<8x4xf32>
    %27 = vector.broadcast %cst_16 : f32 to vector<8x4xf32>
    %28 = arith.minimumf %27, %26 : vector<8x4xf32>
    %c0_17 = arith.constant 0 : index
    %c0_18 = arith.constant 0 : index
    %29 = vector.load %arg6[%c0_17, %c0_18] : memref<8x4xf32, #tpu.memory_space<vmem>>, vector<8x4xf32>
    tpu.vector_store %arg6[%c0_17, %c0_18], %28 {strides = array<i32>} : memref<8x4xf32, #tpu.memory_space<vmem>>, vector<8x4xf32>,
    return
  }
  func.func @transform_0(%arg0: i32) -> (i32, i32) {
    %c0_i32 = arith.constant 0 : i32
    %c0_i32_0 = arith.constant 0 : i32
    return %arg0, %c0_i32 : i32, i32
  }
  func.func @transform_1(%arg0: i32) -> (i32, i32) {
    %c0_i32 = arith.constant 0 : i32
    %c0_i32_0 = arith.constant 0 : i32
    %c0_i32_1 = arith.constant 0 : i32
    return %c0_i32, %c0_i32_0 : i32, i32
  }
  func.func @transform_2(%arg0: i32) -> (i32, i32) {
    %c0_i32 = arith.constant 0 : i32
    %c0_i32_0 = arith.constant 0 : i32
    %c0_i32_1 = arith.constant 0 : i32
    return %c0_i32, %c0_i32_0 : i32, i32
  }
  func.func @transform_3(%arg0: i32) -> (i32, i32) {
    %c0_i32 = arith.constant 0 : i32
    %c0_i32_0 = arith.constant 0 : i32
    %c0_i32_1 = arith.constant 0 : i32
    return %c0_i32, %c0_i32_0 : i32, i32
  }
  func.func @transform_4(%arg0: i32) -> (i32, i32) {
    %c0_i32 = arith.constant 0 : i32
    %c0_i32_0 = arith.constant 0 : i32
    %c0_i32_1 = arith.constant 0 : i32
    return %c0_i32, %c0_i32_0 : i32, i32
  }
  func.func @transform_5(%arg0: i32) -> (i32, i32) {
    %c0_i32 = arith.constant 0 : i32
    %c0_i32_0 = arith.constant 0 : i32
    return %arg0, %c0_i32 : i32, i32
  }
}

</mosaic_0001>

<llo_original>
// kernel: tpu_custom_call.1
$region0: #{tpu_custom_call.1}
  #allocation0 [shape = 'u32[]', space=smem, size = 0x4, offset = 0x4, fixed_abs, tag = 'smem constant byte address 0x4 - core index']
  #allocation1 [shape = 'u32[144,128]{1,0:T(1,128)}', space=vmem, size = 0x12000, scoped, tag = 'internal scratch']
  %s0 = inlined_call_operand.vmem [shape: f32[8,24], index: 0, kind: input, shape index: {}]
  %s1 = inlined_call_operand.hbm [shape: bf16[24,64], index: 1, kind: input, shape index: {}]
  %s2 = inlined_call_operand.vmem [shape: bf16[64,64], index: 2, kind: input, shape index: {}]
  %s3 = inlined_call_operand.vmem [shape: bf16[64,4], index: 3, kind: input, shape index: {}]
  %s4 = inlined_call_operand.vmem [shape: f32[3,64], index: 4, kind: input, shape index: {}]
  %s5 = inlined_call_operand.vmem [shape: f32[8,4], index: 5, kind: output, shape index: {}]
  %s6 = sld [smem:[#allocation0]]
  $region34: #{tpu_custom_call.1} parent=0
    _
  %s8 = ssub.s32 1, %s6
  %s9 = scalar_select 0, %s8, %s6
  $region1: #{tpu_custom_call.1} parent=0
    #allocation2 [shape = 'u8[6144]{0}', space=vmem, size = 0x1800, scoped, tag = 'input window, operand 1, single buffered']
    #allocation3 [shape = 's32[1]{0}', space=sflag, size = 0x4, scoped, tag = 'scoped memory for tpu_custom_call.1']
    %10 = vsyncpa [#allocation3], 0
    // Predicated region
    $region2: #{tpu_custom_call.1} parent=1 // pred_check
      _
    $region3: #{tpu_custom_call.1} parent=1 // pred_check_branch
      %12 = sbr.rel (0) target = $region5
    $region4: #{tpu_custom_call.1} parent=1 // pred_region
      _
    $region5: #{tpu_custom_call.1} parent=1 // pred_fallthru
      _
    // Predicated region
    $region6: #{tpu_custom_call.1} parent=1 // pred_check
      _
    $region7: #{tpu_custom_call.1} parent=1 // pred_check_branch
      %14 = sbr.rel (0) target = $region9
    $region8: #{tpu_custom_call.1} parent=1 // pred_region
      %s16 = ssub.s32 192, 192
      %17 = vsyncadd [#allocation3], %s16
      %s18 = sshll.u32 [#allocation2], 4
      %s19 = int_to_ptr.vmem [resolvable:$true] %s18
      %24 = dma.hbm_to_vmem [thread:$0]  %s1, 192, %s19, [#allocation3], 64, 64, 4
    $region9: #{tpu_custom_call.1} parent=1 // pred_fallthru
      _
    // Predicated region
    $region10: #{tpu_custom_call.1} parent=1 // pred_check
      _
    $region11: #{tpu_custom_call.1} parent=1 // pred_check_branch
      %26 = sbr.rel (0) target = $region13
    $region12: #{tpu_custom_call.1} parent=1 // pred_region
      _
    $region13: #{tpu_custom_call.1} parent=1 // pred_fallthru
      _
    // Predicated region
    $region14: #{tpu_custom_call.1} parent=1 // pred_check
      _
    $region15: #{tpu_custom_call.1} parent=1 // pred_check_branch
      %28 = sbr.rel (0) target = $region17
    $region16: #{tpu_custom_call.1} parent=1 // pred_region
      _
    $region17: #{tpu_custom_call.1} parent=1 // pred_fallthru
      _
    // Predicated region
    $region18: #{tpu_custom_call.1} parent=1 // pred_check
      _
    $region19: #{tpu_custom_call.1} parent=1 // pred_check_branch
      %30 = sbr.rel (0) target = $region21
    $region20: #{tpu_custom_call.1} parent=1 // pred_region
      _
    $region21: #{tpu_custom_call.1} parent=1 // pred_fallthru
      _
    // Predicated region
    $region22: #{tpu_custom_call.1} parent=1 // pred_check
      _
    $region23: #{tpu_custom_call.1} parent=1 // pred_check_branch
      %32 = sbr.rel (0) target = $region25
    $region24: #{tpu_custom_call.1} parent=1 // pred_region
      %33 = dma.done [#allocation3], 192
    $region25: #{tpu_custom_call.1} parent=1 // pred_fallthru
      _
    %v35 = vld [vmem:[%s4] sm:$0x1]
    %v36 = vld [vmem:[%s4 + $0x1] sm:$0x1]
    %v37 = vld [vmem:[%s4 + $0x2] sm:$0x1]
    %v38 = vld [vmem:[%s0] sm:$0xff]
    %v39 = vpack.c.bf16 %v38, %v38
    %v40 = vld [vmem:[#allocation2] sm:$0xf]
    %v41 = vld [vmem:[#allocation2 + $0x4] sm:$0xf]
    %v42 = vld [vmem:[#allocation2 + $0x8] sm:$0xf]
    %v43 = vlaneseq
    %v44 = vshrl.u32 %v43, 7
    %v45 = vsub.s32 0, %v44
    %v46 = vrot.slane %v35, %v45
    %v50 = vunpack.c.l.b16 %v40
    %v51 = vunpack.c.l.b16 %v41
    %v52 = vunpack.c.l.b16 %v42
    %v53 = vpack.c.b16 %v51, %v50
    %v54 = vpack.c.b16 %v52, %v52
    %vm56 = vcmask 195584
    %v58 = vsel %vm56, %v39, 0
    %vm60 = vcmask 1043456
    %v62 = vsel %vm60, %v54, 0
    %64 = vmatprep.subr.bf16.mxu0 0
    %65 = vmatpush1.bf16.msra.mxu0 %v53
    %66 = vmatprep.subr.bf16.mxu0 0
    %67 = vmatpush1.bf16.msra.mxu0 %v62
    %68 = vmatprep.subr.bf16.mxu0 0
    %69 = vmatpush1.bf16.msra.mxu0 0
    %70 = vmatprep.subr.bf16.mxu0 0
    %71 = vmatpush1.bf16.msra.mxu0 0
    %72 = vmatprep.subr.bf16.mxu0 0
    %73 = vmatpush1.bf16.msra.mxu0 0
    %74 = vmatprep.subr.bf16.mxu0 0
    %75 = vmatpush1.bf16.msra.mxu0 0
    %76 = vmatprep.subr.bf16.mxu0 0
    %77 = vmatpush1.bf16.msra.mxu0 0
    %78 = vmatprep.subr.bf16.mxu0 0
    %79 = vmatpush1.bf16.msra.mxu0 0
    %80 = vmatprep.subr.bf16.mxu0 0
    %81 = vmatpush1.bf16.msra.mxu0 0
    %82 = vmatprep.subr.bf16.mxu0 0
    %83 = vmatpush1.bf16.msra.mxu0 0
    %84 = vmatprep.subr.bf16.mxu0 0
    %85 = vmatpush1.bf16.msra.mxu0 0
    %86 = vmatprep.subr.bf16.mxu0 0
    %87 = vmatpush1.bf16.msra.mxu0 0
    %88 = vmatprep.subr.bf16.mxu0 0
    %89 = vmatpush1.bf16.msra.mxu0 0
    %90 = vmatprep.subr.bf16.mxu0 0
    %91 = vmatpush1.bf16.msra.mxu0 0
    %92 = vmatprep.subr.bf16.mxu0 0
    %93 = vmatpush1.bf16.msra.mxu0 0
    %94 = vmatprep.subr.bf16.mxu0 0
    %95 = vmatpush1.bf16.msra.mxu0 0
    %96 = vmatprep.mubr.bf16.mxu0 0
    %97 = vmatmul.mubr.bf16.gmra.mrb[0].mxu0 %v58
    %v98 = vpop.f32.mrb[0].mxu0
    %v99 = vadd.f32 %v46, %v98
    %v100 = vpop.f32.mrb[0].mxu0
    %v101 = vpop.f32.mrb[0].mxu0
    %v102 = vpop.f32.mrb[0].mxu0
    %103 = vdwg.mxu0
    %v104 = vmax.f32 %v99, 0.0
    %v105 = vpack.c.bf16 %v104, %v104
    %v106 = vld [vmem:[%s2] sm:$0xf]
    %v107 = vld [vmem:[%s2 + $0x4] sm:$0xf]
    %v108 = vld [vmem:[%s2 + $0x8] sm:$0xf]
    %v109 = vld [vmem:[%s2 + $0xc] sm:$0xf]
    %v110 = vld [vmem:[%s2 + $0x10] sm:$0xf]
    %v111 = vld [vmem:[%s2 + $0x14] sm:$0xf]
    %v112 = vld [vmem:[%s2 + $0x18] sm:$0xf]
    %v113 = vld [vmem:[%s2 + $0x1c] sm:$0xf]
    %v114 = vlaneseq
    %v115 = vshrl.u32 %v114, 7
    %v116 = vsub.s32 0, %v115
    %v117 = vrot.slane %v36, %v116
    %v126 = vunpack.c.l.b16 %v106
    %v127 = vunpack.c.l.b16 %v107
    %v128 = vunpack.c.l.b16 %v108
    %v129 = vunpack.c.l.b16 %v109
    %v130 = vunpack.c.l.b16 %v110
    %v131 = vunpack.c.l.b16 %v111
    %v132 = vunpack.c.l.b16 %v112
    %v133 = vunpack.c.l.b16 %v113
    %v134 = vpack.c.b16 %v127, %v126
    %v135 = vpack.c.b16 %v129, %v128
    %v136 = vpack.c.b16 %v131, %v130
    %v137 = vpack.c.b16 %v133, %v132
    %vm142 = vcmask 523264
    %v144 = vsel %vm142, %v105, 0
    %146 = vmatprep.subr.bf16.mxu0 0
    %147 = vmatpush1.bf16.msra.mxu0 %v134
    %148 = vmatprep.subr.bf16.mxu0 0
    %149 = vmatpush1.bf16.msra.mxu0 %v135
    %150 = vmatprep.subr.bf16.mxu0 0
    %151 = vmatpush1.bf16.msra.mxu0 %v136
    %152 = vmatprep.subr.bf16.mxu0 0
    %153 = vmatpush1.bf16.msra.mxu0 %v137
    %154 = vmatprep.subr.bf16.mxu0 0
    %155 = vmatpush1.bf16.msra.mxu0 0
    %156 = vmatprep.subr.bf16.mxu0 0
    %157 = vmatpush1.bf16.msra.mxu0 0
    %158 = vmatprep.subr.bf16.mxu0 0
    %159 = vmatpush1.bf16.msra.mxu0 0
    %160 = vmatprep.subr.bf16.mxu0 0
    %161 = vmatpush1.bf16.msra.mxu0 0
    %162 = vmatprep.subr.bf16.mxu0 0
    %163 = vmatpush1.bf16.msra.mxu0 0
    %164 = vmatprep.subr.bf16.mxu0 0
    %165 = vmatpush1.bf16.msra.mxu0 0
    %166 = vmatprep.subr.bf16.mxu0 0
    %167 = vmatpush1.bf16.msra.mxu0 0
    %168 = vmatprep.subr.bf16.mxu0 0
    %169 = vmatpush1.bf16.msra.mxu0 0
    %170 = vmatprep.subr.bf16.mxu0 0
    %171 = vmatpush1.bf16.msra.mxu0 0
    %172 = vmatprep.subr.bf16.mxu0 0
    %173 = vmatpush1.bf16.msra.mxu0 0
    %174 = vmatprep.subr.bf16.mxu0 0
    %175 = vmatpush1.bf16.msra.mxu0 0
    %176 = vmatprep.subr.bf16.mxu0 0
    %177 = vmatpush1.bf16.msra.mxu0 0
    %178 = vmatprep.mubr.bf16.mxu0 0
    %179 = vmatmul.mubr.bf16.gmra.mrb[0].mxu0 %v144
    %v180 = vpop.f32.mrb[0].mxu0
    %v181 = vadd.f32 %v117, %v180
    %v182 = vpop.f32.mrb[0].mxu0
    %v183 = vpop.f32.mrb[0].mxu0
    %v184 = vpop.f32.mrb[0].mxu0
    %185 = vdwg.mxu0
    %v186 = vmax.f32 %v181, 0.0
    %v187 = vpack.c.bf16 %v186, %v186
    %v188 = vld [vmem:[%s3] sm:$0xf]
    %v189 = vld [vmem:[%s3 + $0x4] sm:$0xf]
    %v190 = vld [vmem:[%s3 + $0x8] sm:$0xf]
    %v191 = vld [vmem:[%s3 + $0xc] sm:$0xf]
    %v192 = vld [vmem:[%s3 + $0x10] sm:$0xf]
    %v193 = vld [vmem:[%s3 + $0x14] sm:$0xf]
    %v194 = vld [vmem:[%s3 + $0x18] sm:$0xf]
    %v195 = vld [vmem:[%s3 + $0x1c] sm:$0xf]
    %v196 = vlaneseq
    %v197 = vshrl.u32 %v196, 7
    %v198 = vsub.s32 0, %v197
    %v199 = vrot.slane %v37, %v198
    %v208 = vunpack.c.l.b16 %v188
    %v209 = vunpack.c.l.b16 %v189
    %v210 = vunpack.c.l.b16 %v190
    %v211 = vunpack.c.l.b16 %v191
    %v212 = vunpack.c.l.b16 %v192
    %v213 = vunpack.c.l.b16 %v193
    %v214 = vunpack.c.l.b16 %v194
    %v215 = vunpack.c.l.b16 %v195
    %v216 = vpack.c.b16 %v209, %v208
    %v217 = vpack.c.b16 %v211, %v210
    %v218 = vpack.c.b16 %v213, %v212
    %v219 = vpack.c.b16 %v215, %v214
    %v225 = vsel %vm142, %v187, 0
    %227 = vmatprep.subr.bf16.mxu0 0
    %228 = vmatpush1.bf16.msra.mxu0 %v216
    %229 = vmatprep.subr.bf16.mxu0 0
    %230 = vmatpush1.bf16.msra.mxu0 %v217
    %231 = vmatprep.subr.bf16.mxu0 0
    %232 = vmatpush1.bf16.msra.mxu0 %v218
    %233 = vmatprep.subr.bf16.mxu0 0
    %234 = vmatpush1.bf16.msra.mxu0 %v219
    %235 = vmatprep.subr.bf16.mxu0 0
    %236 = vmatpush1.bf16.msra.mxu0 0
    %237 = vmatprep.subr.bf16.mxu0 0
    %238 = vmatpush1.bf16.msra.mxu0 0
    %239 = vmatprep.subr.bf16.mxu0 0
    %240 = vmatpush1.bf16.msra.mxu0 0
    %241 = vmatprep.subr.bf16.mxu0 0
    %242 = vmatpush1.bf16.msra.mxu0 0
    %243 = vmatprep.subr.bf16.mxu0 0
    %244 = vmatpush1.bf16.msra.mxu0 0
    %245 = vmatprep.subr.bf16.mxu0 0
    %246 = vmatpush1.bf16.msra.mxu0 0
    %247 = vmatprep.subr.bf16.mxu0 0
    %248 = vmatpush1.bf16.msra.mxu0 0
    %249 = vmatprep.subr.bf16.mxu0 0
    %250 = vmatpush1.bf16.msra.mxu0 0
    %251 = vmatprep.subr.bf16.mxu0 0
    %252 = vmatpush1.bf16.msra.mxu0 0
    %253 = vmatprep.subr.bf16.mxu0 0
    %254 = vmatpush1.bf16.msra.mxu0 0
    %255 = vmatprep.subr.bf16.mxu0 0
    %256 = vmatpush1.bf16.msra.mxu0 0
    %257 = vmatprep.subr.bf16.mxu0 0
    %258 = vmatpush1.bf16.msra.mxu0 0
    %259 = vmatprep.mubr.bf16.mxu0 0
    %260 = vmatmul.mubr.bf16.gmra.mrb[0].mxu0 %v225
    %v261 = vpop.f32.mrb[0].mxu0
    %v262 = vadd.f32 %v199, %v261
    %v263 = vpop.f32.mrb[0].mxu0
    %v264 = vpop.f32.mrb[0].mxu0
    %v265 = vpop.f32.mrb[0].mxu0
    %266 = vdwg.mxu0
    %v267 = vtanh.pop %v262
    %v268 = vmax.f32 %v267, -0.9
    %v269 = vmin.f32 %v268, 0.9
    %vm270 = vcmask 31744
    %271 = vst.msk [vmem:[%s5] sm:$0xff] %vm270, %v269
    // Predicated region
    $region26: #{tpu_custom_call.1} parent=1 // pred_check
      _
    $region27: #{tpu_custom_call.1} parent=1 // pred_check_branch
      %273 = sbr.rel (0) target = $region29
    $region28: #{tpu_custom_call.1} parent=1 // pred_region
      _
    $region29: #{tpu_custom_call.1} parent=1 // pred_fallthru
      _
    // Predicated region
    $region30: #{tpu_custom_call.1} parent=1 // pred_check
      _
    $region31: #{tpu_custom_call.1} parent=1 // pred_check_branch
      %275 = sbr.rel (0) target = $region33
    $region32: #{tpu_custom_call.1} parent=1 // pred_region
      _
    $region33: #{tpu_custom_call.1} parent=1 // pred_fallthru
      _
    %276 = vsyncpa [#allocation3], 1

</llo_original>
